<compile_context>
chip_gen: v7x
topology: tpu7x:2x2x1
jax: 0.10.0
libtpu: 0.0.40
codegen_flags: <defaults>
</compile_context>

<pallas_src>
import jax
import jax.numpy as jnp
from jax.experimental import pallas as pl
from jax.experimental.pallas import tpu as pltpu


def _highway_kernel(x1_mm_ref, w_ref, b_ref, x1_ref, x2_ref, out_ref, acc_ref):
    """One (i, j, k) grid step.

    x1_mm_ref : (bm, bk)  tile of in_1 used as matmul LHS
    w_ref     : (bk, bn)  tile of the weight
    b_ref     : (1,  bn)  bias row
    x1_ref    : (bm, bn)  tile of in_1 used for gating
    x2_ref    : (bm, bn)  tile of in_2 used for gating
    out_ref   : (bm, bn)  output tile
    acc_ref   : (bm, bn)  f32 accumulator scratch (resident across k)
    """
    k = pl.program_id(2)

    @pl.when(k == 0)
    def _():
        acc_ref[...] = jnp.zeros_like(acc_ref)

    acc_ref[...] += jnp.dot(
        x1_mm_ref[...].astype(jnp.float32),
        w_ref[...].astype(jnp.float32),
        preferred_element_type=jnp.float32,
    )

    @pl.when(k == pl.num_programs(2) - 1)
    def _():
        t = acc_ref[...] + b_ref[...].astype(jnp.float32)      # (bm,bn) + (1,bn)
        gate = jax.nn.sigmoid(t)                                # EUP exp, hidden under DMA
        x1 = x1_ref[...].astype(jnp.float32)
        x2 = x2_ref[...].astype(jnp.float32)
        out_ref[...] = (gate * x2 + (1.0 - gate) * x1).astype(out_ref.dtype)


def _pick_tile(dim, cap, align):
    """Largest divisor of `dim` that is <= cap and a multiple of `align`;
    falls back to the full extent if no aligned divisor exists (then the
    block equals the array dim, which also satisfies the (8,128) rule)."""
    if dim <= cap:
        return dim
    for t in range(min(cap, dim), align - 1, -1):
        if dim % t == 0 and t % align == 0:
            return t
    return dim


def highway_forward(in_1, in_2, w, bias=None, *, bm=None, bn=None, bk=None):
    """Pallas equivalent of HighWay(f_in, f_out).forward(in_1, in_2).

    in_1, in_2 : [B, D] arrays
    w          : [D, D]  (the gating formula requires f_in == f_out)
    bias       : [D] or None
    Returns [B, D].
    """
    B, D = in_1.shape
    assert in_2.shape == (B, D)
    assert w.shape == (D, D), "HighWay gating requires f_in == f_out"

    if bias is None:
        bias = jnp.zeros((D,), dtype=w.dtype)
    b2d = bias.reshape(1, D)

    # Tile selection: sublane axis (batch) aligned to 8, lane axes aligned to
    # 128 or taken at full extent.  Caps of 512 keep 2x double-buffered input
    # tiles + the f32 accumulator comfortably inside scoped VMEM on every
    # generation (v7x: 64 MiB physical / 32 MiB default scoped), while still
    # giving a multi-step grid for pipelining / dual-TensorCore sharding once
    # B or D is large.
    if bm is None:
        bm = _pick_tile(B, 512, 8)
    if bn is None:
        bn = _pick_tile(D, 512, 128)
    if bk is None:
        bk = _pick_tile(D, 512, 128)
    assert B % bm == 0 and D % bn == 0 and D % bk == 0

    grid = (B // bm, D // bn, D // bk)

    # Explicit VMEM budget (2x double buffering per streamed operand + f32
    # accumulator), clamped so it never exceeds what v7x can offer.
    itemsize = jnp.dtype(in_1.dtype).itemsize
    est = (2 * itemsize * (bm * bk + bk * bn + 8 * bn + 2 * bm * bn)  # inputs
           + 2 * itemsize * bm * bn                                    # output
           + 4 * bm * bn)                                              # accumulator
    vmem_limit = int(min(max(4 * est, 16 << 20), 96 << 20))

    out = pl.pallas_call(
        _highway_kernel,
        out_shape=jax.ShapeDtypeStruct((B, D), in_1.dtype),
        grid_spec=pltpu.PrefetchScalarGridSpec(
            num_scalar_prefetch=0,
            grid=grid,
            in_specs=[
                pl.BlockSpec((bm, bk), lambda i, j, k: (i, k)),   # in_1 (matmul LHS)
                pl.BlockSpec((bk, bn), lambda i, j, k: (k, j)),   # w
                pl.BlockSpec((1, bn), lambda i, j, k: (0, j)),    # bias row
                pl.BlockSpec((bm, bn), lambda i, j, k: (i, j)),   # in_1 (gating)
                pl.BlockSpec((bm, bn), lambda i, j, k: (i, j)),   # in_2 (gating)
            ],
            out_specs=pl.BlockSpec((bm, bn), lambda i, j, k: (i, j)),
            scratch_shapes=[pltpu.VMEM((bm, bn), jnp.float32)],
        ),
        compiler_params=pltpu.CompilerParams(
            dimension_semantics=("parallel", "parallel", "arbitrary"),
            vmem_limit_bytes=vmem_limit,
        ),
    )(in_1, w, b2d, in_1, in_2)
    return out


if __name__ == "__main__":
    # Small shapes consistent with the module: batch=8, hidden=32 (f_in == f_out).
    B, D = 8, 32

    key = jax.random.PRNGKey(0)
    k1, k2, k3 = jax.random.split(key, 3)
    in_1 = jax.random.normal(k1, (B, D), dtype=jnp.float32)
    in_2 = jax.random.normal(k2, (B, D), dtype=jnp.float32)
    # Xavier-uniform weight init (same scheme as the PyTorch module); bias = 0.
    limit = (6.0 / (D + D)) ** 0.5
    w = jax.random.uniform(k3, (D, D), dtype=jnp.float32, minval=-limit, maxval=limit)
    bias = jnp.zeros((D,), dtype=jnp.float32)

    out = highway_forward(in_1, in_2, w, bias)
    jax.block_until_ready(out)

    # Pure-JAX reference (identical semantics to HighWay.forward).
    t = in_1 @ w + bias
    gate = jax.nn.sigmoid(t)
    ref = gate * in_2 + (1.0 - gate) * in_1

    assert out.shape == (B, D)
    assert jnp.allclose(out, ref, atol=1e-5, rtol=1e-5)
    print("KERNEL_OK")
</pallas_src>

<mosaic_0001>
module attributes {stable_mosaic.version = 11 : i64} {
  func.func @_highway_kernel(%arg0: i32, %arg1: i32, %arg2: i32, %arg3: memref<8x32xf32, #tpu.memory_space<vmem>>, %arg4: memref<32x32xf32, #tpu.memory_space<vmem>>, %arg5: memref<1x32xf32, #tpu.memory_space<vmem>>, %arg6: memref<8x32xf32, #tpu.memory_space<vmem>>, %arg7: memref<8x32xf32, #tpu.memory_space<vmem>>, %arg8: memref<8x32xf32, #tpu.memory_space<vmem>>, %arg9: memref<8x32xf32, #tpu.memory_space<vmem>>) attributes {dimension_semantics = [#tpu.dimension_semantics<parallel>, #tpu.dimension_semantics<parallel>, #tpu.dimension_semantics<arbitrary>], iteration_bounds = array<i64: 1, 1, 1>, scalar_prefetch = 0 : i64, scratch_operands = 1 : i64, tpu.core_type = #tpu.core_type<tc>, window_params = [{transform_indices = @transform_0, window_bounds = array<i64: 8, 32>}, {transform_indices = @transform_1, window_bounds = array<i64: 32, 32>}, {transform_indices = @transform_2, window_bounds = array<i64: 1, 32>}, {transform_indices = @transform_3, window_bounds = array<i64: 8, 32>}, {transform_indices = @transform_4, window_bounds = array<i64: 8, 32>}, {transform_indices = @transform_5, window_bounds = array<i64: 8, 32>}]} {
    %c0_i32 = arith.constant 0 : i32
    %0 = arith.cmpi eq, %arg2, %c0_i32 : i32
    %1 = arith.extui %0 : i1 to i32
    %c0_i32_0 = arith.constant 0 : i32
    %2 = arith.cmpi ne, %1, %c0_i32_0 : i32
    scf.if %2 {
      %cst_10 = arith.constant 0.000000e+00 : f32
      %12 = vector.broadcast %cst_10 : f32 to vector<8x32xf32>
      %c0_11 = arith.constant 0 : index
      %c0_12 = arith.constant 0 : index
      %13 = vector.load %arg9[%c0_11, %c0_12] : memref<8x32xf32, #tpu.memory_space<vmem>>, vector<8x32xf32>
      tpu.vector_store %arg9[%c0_11, %c0_12], %12 {strides = array<i32>} : memref<8x32xf32, #tpu.memory_space<vmem>>, vector<8x32xf32>,
    } else {
    }
    %c0 = arith.constant 0 : index
    %c0_1 = arith.constant 0 : index
    %3 = vector.load %arg9[%c0, %c0_1] : memref<8x32xf32, #tpu.memory_space<vmem>>, vector<8x32xf32>
    %c0_2 = arith.constant 0 : index
    %c0_3 = arith.constant 0 : index
    %4 = vector.load %arg3[%c0_2, %c0_3] : memref<8x32xf32, #tpu.memory_space<vmem>>, vector<8x32xf32>
    %c0_4 = arith.constant 0 : index
    %c0_5 = arith.constant 0 : index
    %5 = vector.load %arg4[%c0_4, %c0_5] : memref<32x32xf32, #tpu.memory_space<vmem>>, vector<32x32xf32>
    %cst = arith.constant dense<0.000000e+00> : vector<8x32xf32>
    %6 = tpu.matmul %4, %5, %cst {dimension_numbers = #tpu.dot_dimension_numbers<[1], [0], [0], [1], [0, 0, 1, 1], [], []>} : vector<8x32xf32>, vector<32x32xf32>, vector<8x32xf32> -> vector<8x32xf32>
    %7 = arith.addf %3, %6 : vector<8x32xf32>
    %c0_6 = arith.constant 0 : index
    %c0_7 = arith.constant 0 : index
    %8 = vector.load %arg9[%c0_6, %c0_7] : memref<8x32xf32, #tpu.memory_space<vmem>>, vector<8x32xf32>
    tpu.vector_store %arg9[%c0_6, %c0_7], %7 {strides = array<i32>} : memref<8x32xf32, #tpu.memory_space<vmem>>, vector<8x32xf32>,
    %c0_i32_8 = arith.constant 0 : i32
    %9 = arith.cmpi eq, %arg2, %c0_i32_8 : i32
    %10 = arith.extui %9 : i1 to i32
    %c0_i32_9 = arith.constant 0 : i32
    %11 = arith.cmpi ne, %10, %c0_i32_9 : i32
    scf.if %11 {
      %c0_10 = arith.constant 0 : index
      %c0_11 = arith.constant 0 : index
      %12 = vector.load %arg9[%c0_10, %c0_11] : memref<8x32xf32, #tpu.memory_space<vmem>>, vector<8x32xf32>
      %c0_12 = arith.constant 0 : index
      %c0_13 = arith.constant 0 : index
      %13 = vector.load %arg5[%c0_12, %c0_13] : memref<1x32xf32, #tpu.memory_space<vmem>>, vector<1x32xf32>
      %14 = vector.broadcast %13 : vector<1x32xf32> to vector<8x32xf32>
      %15 = arith.addf %12, %14 : vector<8x32xf32>
      %16 = arith.negf %15 : vector<8x32xf32>
      %17 = math.exp %16 : vector<8x32xf32>
      %cst_14 = arith.constant 1.000000e+00 : f32
      %18 = vector.broadcast %cst_14 : f32 to vector<8x32xf32>
      %19 = arith.addf %18, %17 : vector<8x32xf32>
      %20 = arith.divf %18, %19 : vector<8x32xf32>
      %c0_15 = arith.constant 0 : index
      %c0_16 = arith.constant 0 : index
      %21 = vector.load %arg6[%c0_15, %c0_16] : memref<8x32xf32, #tpu.memory_space<vmem>>, vector<8x32xf32>
      %c0_17 = arith.constant 0 : index
      %c0_18 = arith.constant 0 : index
      %22 = vector.load %arg7[%c0_17, %c0_18] : memref<8x32xf32, #tpu.memory_space<vmem>>, vector<8x32xf32>
      %23 = arith.mulf %20, %22 : vector<8x32xf32>
      %cst_19 = arith.constant 1.000000e+00 : f32
      %24 = vector.broadcast %cst_19 : f32 to vector<8x32xf32>
      %25 = arith.subf %24, %20 : vector<8x32xf32>
      %26 = arith.mulf %25, %21 : vector<8x32xf32>
      %27 = arith.addf %23, %26 : vector<8x32xf32>
      %c0_20 = arith.constant 0 : index
      %c0_21 = arith.constant 0 : index
      %28 = vector.load %arg8[%c0_20, %c0_21] : memref<8x32xf32, #tpu.memory_space<vmem>>, vector<8x32xf32>
      tpu.vector_store %arg8[%c0_20, %c0_21], %27 {strides = array<i32>} : memref<8x32xf32, #tpu.memory_space<vmem>>, vector<8x32xf32>,
    } else {
    }
    return
  }
  func.func @transform_0(%arg0: i32, %arg1: i32, %arg2: i32) -> (i32, i32) {
    %c0_i32 = arith.constant 0 : i32
    return %arg0, %arg2 : i32, i32
  }
  func.func @transform_1(%arg0: i32, %arg1: i32, %arg2: i32) -> (i32, i32) {
    %c0_i32 = arith.constant 0 : i32
    return %arg2, %arg1 : i32, i32
  }
  func.func @transform_2(%arg0: i32, %arg1: i32, %arg2: i32) -> (i32, i32) {
    %c0_i32 = arith.constant 0 : i32
    %c0_i32_0 = arith.constant 0 : i32
    return %c0_i32, %arg1 : i32, i32
  }
  func.func @transform_3(%arg0: i32, %arg1: i32, %arg2: i32) -> (i32, i32) {
    %c0_i32 = arith.constant 0 : i32
    return %arg0, %arg1 : i32, i32
  }
  func.func @transform_4(%arg0: i32, %arg1: i32, %arg2: i32) -> (i32, i32) {
    %c0_i32 = arith.constant 0 : i32
    return %arg0, %arg1 : i32, i32
  }
  func.func @transform_5(%arg0: i32, %arg1: i32, %arg2: i32) -> (i32, i32) {
    %c0_i32 = arith.constant 0 : i32
    return %arg0, %arg1 : i32, i32
  }
}

</mosaic_0001>

<llo_original>
// kernel: tpu_custom_call.1
$region0: #{tpu_custom_call.1}
  #allocation0 [shape = 'u32[]', space=smem, size = 0x4, offset = 0x4, fixed_abs, tag = 'smem constant byte address 0x4 - core index']
  #allocation1 [shape = 'u32[144,128]{1,0:T(1,128)}', space=vmem, size = 0x12000, scoped, tag = 'internal scratch']
  #allocation2 [shape = 'f32[8,32]{1,0:T(8,128)}', space=vmem, size = 0x1000, scoped, tag = 'scratch operand']
  %s0 = inlined_call_operand.hbm [shape: f32[8,32], index: 0, kind: input, shape index: {}]
  %s1 = inlined_call_operand.hbm [shape: f32[32,32], index: 1, kind: input, shape index: {}]
  %s2 = inlined_call_operand.vmem [shape: f32[1,32], index: 2, kind: input, shape index: {}]
  %s3 = inlined_call_operand.vmem [shape: f32[8,32], index: 3, kind: input, shape index: {}]
  %s4 = inlined_call_operand.hbm [shape: f32[8,32], index: 4, kind: input, shape index: {}]
  %s5 = inlined_call_operand.hbm [shape: f32[8,32], index: 5, kind: output, shape index: {}]
  %s6 = sld [smem:[#allocation0]]
  $region50: #{tpu_custom_call.1} parent=0
    _
  %s8 = ssub.s32 1, %s6
  %s9 = scalar_select 0, %s8, %s6
  $region1: #{tpu_custom_call.1} parent=0
    #allocation3 [shape = 'u8[4096]{0}', space=vmem, size = 0x1000, scoped, tag = 'input window, operand 0, single buffered']
    #allocation4 [shape = 's32[1]{0}', space=sflag, size = 0x4, scoped, tag = 'scoped memory for tpu_custom_call.1']
    #allocation5 [shape = 's32[1]{0}', space=sflag, size = 0x4, scoped, tag = 'scoped memory for tpu_custom_call.1']
    #allocation6 [shape = 'u8[16384]{0}', space=vmem, size = 0x4000, scoped, tag = 'input window, operand 1, single buffered']
    #allocation7 [shape = 's32[1]{0}', space=sflag, size = 0x4, scoped, tag = 'scoped memory for tpu_custom_call.1']
    #allocation8 [shape = 'u8[4096]{0}', space=vmem, size = 0x1000, scoped, tag = 'input window, operand 4, single buffered']
    #allocation9 [shape = 'u8[4096]{0}', space=vmem, size = 0x1000, scoped, tag = 'output window, operand 0, single buffered']
    %10 = vsyncpa [#allocation4], 0
    %11 = vsyncpa [#allocation7], 0
    %12 = vsyncpa [#allocation5], 0
    // Predicated region
    $region2: #{tpu_custom_call.1} parent=1 // pred_check
      _
    $region3: #{tpu_custom_call.1} parent=1 // pred_check_branch
      %14 = sbr.rel (0) target = $region5
    $region4: #{tpu_custom_call.1} parent=1 // pred_region
      %s16 = ssub.s32 128, 128
      %17 = vsyncadd [#allocation4], %s16
      %s19 = sshll.u32 [#allocation3], 4
      %s20 = int_to_ptr.vmem [resolvable:$true] %s19
      %22 = dma.hbm_to_vmem [thread:$0]  %s0, 128, %s20, [#allocation4]
    $region5: #{tpu_custom_call.1} parent=1 // pred_fallthru
      _
    // Predicated region
    $region6: #{tpu_custom_call.1} parent=1 // pred_check
      _
    $region7: #{tpu_custom_call.1} parent=1 // pred_check_branch
      %24 = sbr.rel (0) target = $region9
    $region8: #{tpu_custom_call.1} parent=1 // pred_region
      %s26 = ssub.s32 512, 512
      %27 = vsyncadd [#allocation7], %s26
      %s28 = sshll.u32 [#allocation6], 4
      %s29 = int_to_ptr.vmem [resolvable:$true] %s28
      %34 = dma.hbm_to_vmem [thread:$0]  %s1, 512, %s29, [#allocation7], 128, 128, 8
    $region9: #{tpu_custom_call.1} parent=1 // pred_fallthru
      _
    // Predicated region
    $region10: #{tpu_custom_call.1} parent=1 // pred_check
      _
    $region11: #{tpu_custom_call.1} parent=1 // pred_check_branch
      %36 = sbr.rel (0) target = $region13
    $region12: #{tpu_custom_call.1} parent=1 // pred_region
      _
    $region13: #{tpu_custom_call.1} parent=1 // pred_fallthru
      _
    // Predicated region
    $region14: #{tpu_custom_call.1} parent=1 // pred_check
      _
    $region15: #{tpu_custom_call.1} parent=1 // pred_check_branch
      %38 = sbr.rel (0) target = $region17
    $region16: #{tpu_custom_call.1} parent=1 // pred_region
      _
    $region17: #{tpu_custom_call.1} parent=1 // pred_fallthru
      _
    // Predicated region
    $region18: #{tpu_custom_call.1} parent=1 // pred_check
      _
    $region19: #{tpu_custom_call.1} parent=1 // pred_check_branch
      %40 = sbr.rel (0) target = $region21
    $region20: #{tpu_custom_call.1} parent=1 // pred_region
      %s42 = ssub.s32 128, 128
      %43 = vsyncadd [#allocation7], %s42
      %s45 = sshll.u32 [#allocation8], 4
      %s46 = int_to_ptr.vmem [resolvable:$true] %s45
      %48 = dma.hbm_to_vmem [thread:$0]  %s4, 128, %s46, [#allocation7]
    $region21: #{tpu_custom_call.1} parent=1 // pred_fallthru
      _
    // Predicated region
    $region22: #{tpu_custom_call.1} parent=1 // pred_check
      _
    $region23: #{tpu_custom_call.1} parent=1 // pred_check_branch
      %50 = sbr.rel (0) target = $region25
    $region24: #{tpu_custom_call.1} parent=1 // pred_region
      %51 = dma.done [#allocation4], 128
    $region25: #{tpu_custom_call.1} parent=1 // pred_fallthru
      _
    // Predicated region
    $region26: #{tpu_custom_call.1} parent=1 // pred_check
      _
    $region27: #{tpu_custom_call.1} parent=1 // pred_check_branch
      %53 = sbr.rel (0) target = $region29
    $region28: #{tpu_custom_call.1} parent=1 // pred_region
      %54 = dma.done [#allocation7], 512
    $region29: #{tpu_custom_call.1} parent=1 // pred_fallthru
      _
    // Predicated region
    $region30: #{tpu_custom_call.1} parent=1 // pred_check
      _
    $region31: #{tpu_custom_call.1} parent=1 // pred_check_branch
      %56 = sbr.rel (0) target = $region33
    $region32: #{tpu_custom_call.1} parent=1 // pred_region
      %57 = dma.done [#allocation7], 128
    $region33: #{tpu_custom_call.1} parent=1 // pred_fallthru
      _
    %p58 = scmp.eq.s32.totalorder 0, 0
    // Predicated region
    $region34: #{tpu_custom_call.1} parent=1 // pred_check
      %p59 = pneg %p58
    $region35: #{tpu_custom_call.1} parent=1 // pred_check_branch
      %61 = sbr.rel (%p59) target = $region37
    $region36: #{tpu_custom_call.1} parent=1 // pred_region
      %vm62 = vcmask 261120
      %63 = vst.msk [vmem:[#allocation2] sm:$0xff] %vm62, 0.0
    $region37: #{tpu_custom_call.1} parent=1 // pred_fallthru
      _
    %v64 = vld [vmem:[#allocation2] sm:$0xff]
    %v65 = vld [vmem:[#allocation3] sm:$0xff]
    %v66 = vld [vmem:[#allocation6] sm:$0xff]
    %v67 = vld [vmem:[#allocation6 + $0x8] sm:$0xff]
    %v68 = vld [vmem:[#allocation6 + $0x10] sm:$0xff]
    %v69 = vld [vmem:[#allocation6 + $0x18] sm:$0xff]
    %vm70 = vcmask 261120
    %v72 = vsel %vm70, %v65, 0
    %74 = vmatprep.subr.mxu0 0.0
    %75 = vmatpush1.msra.mxu0 %v66
    %76 = vmatprep.subr.mxu0 0.0
    %77 = vmatpush1.msra.mxu0 %v67
    %78 = vmatprep.subr.mxu0 0.0
    %79 = vmatpush1.msra.mxu0 %v68
    %80 = vmatprep.subr.mxu0 0.0
    %81 = vmatpush1.msra.mxu0 %v69
    %82 = vmatprep.subr.mxu0 0.0
    %83 = vmatpush1.msra.mxu0 0.0
    %84 = vmatprep.subr.mxu0 0.0
    %85 = vmatpush1.msra.mxu0 0.0
    %86 = vmatprep.subr.mxu0 0.0
    %87 = vmatpush1.msra.mxu0 0.0
    %88 = vmatprep.subr.mxu0 0.0
    %89 = vmatpush1.msra.mxu0 0.0
    %90 = vmatprep.subr.mxu0 0.0
    %91 = vmatpush1.msra.mxu0 0.0
    %92 = vmatprep.subr.mxu0 0.0
    %93 = vmatpush1.msra.mxu0 0.0
    %94 = vmatprep.subr.mxu0 0.0
    %95 = vmatpush1.msra.mxu0 0.0
    %96 = vmatprep.subr.mxu0 0.0
    %97 = vmatpush1.msra.mxu0 0.0
    %98 = vmatprep.subr.mxu0 0.0
    %99 = vmatpush1.msra.mxu0 0.0
    %100 = vmatprep.subr.mxu0 0.0
    %101 = vmatpush1.msra.mxu0 0.0
    %102 = vmatprep.subr.mxu0 0.0
    %103 = vmatpush1.msra.mxu0 0.0
    %104 = vmatprep.subr.mxu0 0.0
    %105 = vmatpush1.msra.mxu0 0.0
    %106 = vmatprep.subr.mxu0 0.0
    %107 = vmatpush1.msra.mxu0 0.0
    %108 = vmatprep.subr.mxu0 0.0
    %109 = vmatpush1.msra.mxu0 0.0
    %110 = vmatprep.subr.mxu0 0.0
    %111 = vmatpush1.msra.mxu0 0.0
    %112 = vmatprep.subr.mxu0 0.0
    %113 = vmatpush1.msra.mxu0 0.0
    %114 = vmatprep.subr.mxu0 0.0
    %115 = vmatpush1.msra.mxu0 0.0
    %116 = vmatprep.subr.mxu0 0.0
    %117 = vmatpush1.msra.mxu0 0.0
    %118 = vmatprep.subr.mxu0 0.0
    %119 = vmatpush1.msra.mxu0 0.0
    %120 = vmatprep.subr.mxu0 0.0
    %121 = vmatpush1.msra.mxu0 0.0
    %122 = vmatprep.subr.mxu0 0.0
    %123 = vmatpush1.msra.mxu0 0.0
    %124 = vmatprep.subr.mxu0 0.0
    %125 = vmatpush1.msra.mxu0 0.0
    %126 = vmatprep.subr.mxu0 0.0
    %127 = vmatpush1.msra.mxu0 0.0
    %128 = vmatprep.subr.mxu0 0.0
    %129 = vmatpush1.msra.mxu0 0.0
    %130 = vmatprep.subr.mxu0 0.0
    %131 = vmatpush1.msra.mxu0 0.0
    %132 = vmatprep.subr.mxu0 0.0
    %133 = vmatpush1.msra.mxu0 0.0
    %134 = vmatprep.subr.mxu0 0.0
    %135 = vmatpush1.msra.mxu0 0.0
    %136 = vmatprep.subr.mxu0 0.0
    %137 = vmatpush1.msra.mxu0 0.0
    %138 = vmatprep.mubr.f32.mxu0 0.0
    %139 = vmatmul.mubr.f32.gmra.mrb[0].mxu0 %v72
    %v140 = vpop.f32.mrb[0].mxu0
    %v141 = vadd.f32 0.0, %v140
    %v142 = vpop.f32.mrb[0].mxu0
    %143 = vdwg.mxu0
    %v144 = vadd.f32 %v64, %v141
    %145 = vst.msk [vmem:[#allocation2] sm:$0xff] %vm70, %v144
    // Predicated region
    $region38: #{tpu_custom_call.1} parent=1 // pred_check
      %p146 = pneg %p58
    $region39: #{tpu_custom_call.1} parent=1 // pred_check_branch
      %148 = sbr.rel (%p146) target = $region41
    $region40: #{tpu_custom_call.1} parent=1 // pred_region
      %v149 = vld [vmem:[#allocation2] sm:$0xff]
      %v150 = vld [vmem:[%s2] sm:$0x1]
      %v152 = vlaneseq
      %v153 = vshrl.u32 %v152, 7
      %v154 = vsub.s32 0, %v153
      %v155 = vrot.slane %v150, %v154
      %v157 = vadd.f32 %v149, %v155
      %v158 = vxor.u32 %v157, 2147483648
      %v159 = vmul.f32 %v158, 1.442695
      %v160 = vpow.pop %v159
      %v161 = vadd.f32 %v160, 1.0
      %v162 = vrcp.pop %v161
      %v163 = vmul.f32 1.0, %v162
      %v164 = vld [vmem:[%s3] sm:$0xff]
      %v165 = vld [vmem:[#allocation8] sm:$0xff]
      %v166 = vmul.f32 %v163, %v165
      %v167 = vsub.f32 1.0, %v163
      %v168 = vmul.f32 %v167, %v164
      %v169 = vadd.f32 %v166, %v168
      %170 = vst.msk [vmem:[#allocation9] sm:$0xff] %vm70, %v169
    $region41: #{tpu_custom_call.1} parent=1 // pred_fallthru
      _
    // Predicated region
    $region42: #{tpu_custom_call.1} parent=1 // pred_check
      _
    $region43: #{tpu_custom_call.1} parent=1 // pred_check_branch
      %172 = sbr.rel (0) target = $region45
    $region44: #{tpu_custom_call.1} parent=1 // pred_region
      %s174 = ssub.s32 128, 128
      %175 = vsyncadd [#allocation5], %s174
      %s177 = sshll.u32 [#allocation9], 4
      %s178 = int_to_ptr.vmem [resolvable:$true] %s177
      %180 = dma.vmem_to_hbm [thread:$0]  %s178, 128, %s5, [#allocation5]
    $region45: #{tpu_custom_call.1} parent=1 // pred_fallthru
      _
    // Predicated region
    $region46: #{tpu_custom_call.1} parent=1 // pred_check
      _
    $region47: #{tpu_custom_call.1} parent=1 // pred_check_branch
      %182 = sbr.rel (0) target = $region49
    $region48: #{tpu_custom_call.1} parent=1 // pred_region
      %183 = dma.done [#allocation5], 128
    $region49: #{tpu_custom_call.1} parent=1 // pred_fallthru
      _
    %184 = vsyncpa [#allocation4], 1
    %185 = vsyncpa [#allocation7], 1
    %186 = vsyncpa [#allocation5], 1

</llo_original>
